<compile_context>
chip_gen: v7x
topology: tpu7x:2x2x1
jax: 0.10.0
libtpu: 0.0.40
codegen_flags: <defaults>
</compile_context>

<pallas_src>
import jax
import jax.numpy as jnp
from jax import lax
from jax.experimental import pallas as pl
from jax.experimental.pallas import tpu as pltpu


# ----------------------------------------------------------------------------
# Kernels
# ----------------------------------------------------------------------------
def _dot_nt(x, w):
    # (tm, tk) . (tn, tk)^T -> (tm, tn), f32 accumulation on the MXU.
    # Weight stays in nn.Linear (N, K) layout; K axes contracted directly.
    # TODO(synk): dump MLIR (pl.lower_as_mlir) at production shapes and confirm
    # Mosaic does not insert per-tile XLU transposes; if it does, pre-transpose
    # W once wrapper-side to (K, N) instead.
    return lax.dot_general(
        x,
        w,
        dimension_numbers=(((1,), (1,)), ((), ())),
        preferred_element_type=jnp.float32,
    )


def _linear_kernel_single(x_ref, w_ref, o_ref):
    # Whole K in one tile: no accumulator, no pl.when -- minimal step overhead.
    o_ref[...] = _dot_nt(x_ref[...], w_ref[...]).astype(o_ref.dtype)


def _linear_kernel_acc_in_out(x_ref, w_ref, o_ref):
    # f32 output: accumulate directly into the resident output block.
    k = pl.program_id(2)
    p = _dot_nt(x_ref[...], w_ref[...])

    @pl.when(k == 0)
    def _():
        o_ref[...] = p            # direct store: saves zero vst + vld + adds

    @pl.when(k != 0)
    def _():
        o_ref[...] += p


def _linear_kernel_acc_scratch(x_ref, w_ref, o_ref, acc_ref):
    # Narrow output dtype: f32 VMEM accumulator, cast once at the end.
    k = pl.program_id(2)
    p = _dot_nt(x_ref[...], w_ref[...])

    @pl.when(k == 0)
    def _():
        acc_ref[...] = p

    @pl.when(k != 0)
    def _():
        acc_ref[...] += p

    @pl.when(k == pl.num_programs(2) - 1)
    def _():
        o_ref[...] = acc_ref[...].astype(o_ref.dtype)


# ----------------------------------------------------------------------------
# Wrapper helpers
# ----------------------------------------------------------------------------
def _round_up(v, m):
    return ((v + m - 1) // m) * m


def _largest_divisor_leq(n, target):
    """Largest divisor of n that is <= target (n >= 1)."""
    target = max(1, min(n, target))
    best = 1
    d = 1
    while d * d <= n:
        if n % d == 0:
            if d <= target:
                best = max(best, d)
            q = n // d
            if q <= target:
                best = max(best, q)
        d += 1
    return best


def _vmem_cap_bytes():
    # v5e/v6e: 128 MiB VMEM per core -> allow large tiles.
    # v7x (and unknown): only 64 MiB per TensorCore -> stay conservative.
    try:
        kind = jax.devices()[0].device_kind.lower()
    except Exception:  # pragma: no cover
        kind = ""
    if "v5" in kind or "v6" in kind:
        return 100 * 1024 * 1024
    return 48 * 1024 * 1024


# ----------------------------------------------------------------------------
# Public entry point
# ----------------------------------------------------------------------------
def my_linear(x, weight, *, tm=None, tn=None, tk=None,
              compute_dtype=jnp.bfloat16):
    """y = x @ weight.T  (weight is (out_dim, in_dim), nn.Linear convention).

    Operands are cast to `compute_dtype` (bf16 by default); every reduction
    path accumulates in f32 on the MXU and casts back to x.dtype exactly once.
    """
    orig_shape = x.shape
    K = orig_shape[-1]
    N, K_w = weight.shape
    assert K == K_w, "in_dim mismatch between x and weight"

    out_dtype = x.dtype
    out_bytes = jnp.dtype(out_dtype).itemsize
    cd = jnp.dtype(compute_dtype)
    cd_bytes = cd.itemsize

    x2 = x.reshape(-1, K).astype(cd)
    w = weight.astype(cd)
    M = x2.shape[0]

    # --- thin hardware-granularity padding only (no tile-multiple re-pad) ---
    # Sublane packing: 8 rows for 32-bit, 16 for bf16, 32 for int8/fp8; cover
    # both the compute dtype (input blocks) and the output dtype.
    gran_m = 32 // min(cd_bytes, out_bytes)
    Mp = _round_up(M, gran_m)
    Kp = _round_up(K, 128)
    Np = _round_up(N, 128)
    if (Mp, Kp) != (M, K):
        x2 = jnp.pad(x2, ((0, Mp - M), (0, Kp - K)))
    if (Np, Kp) != (N, K):
        w = jnp.pad(w, ((0, Np - N), (0, Kp - K)))

    # --- tile selection ------------------------------------------------------
    # HBM traffic ~= nt*|x| + mt*|W| + |out|: grow tn when x dominates (M>>N),
    # grow tm when W dominates (N>>M).
    cap = _vmem_cap_bytes()
    if Mp >= 2 * Np:
        tm_auto, tn_auto = 256, 1024
    elif Np >= 2 * Mp:
        tm_auto, tn_auto = 1024, 256
    else:
        tm_auto, tn_auto = 512, 512
    tm_t = tm if tm is not None else tm_auto
    tn_t = tn if tn is not None else tn_auto
    tk_t = tk if tk is not None else (4096 if cap > 64 * 1024 * 1024 else 2048)

    # Tiles are divisors of the padded dims -> ceil-div grids without any
    # full-tensor re-padding of x / W and no masked partial stores.
    tm = gran_m * _largest_divisor_leq(Mp // gran_m, max(1, tm_t // gran_m))
    mt = Mp // tm

    tn_units_target = max(1, tn_t // 128)
    if tn is None and mt == 1 and (Np // 128) >= 2:
        # Small-M (decode) regime on v7x: keep nt >= 2 so the parallel N axis
        # can shard across the two TensorCores.
        tn_units_target = min(tn_units_target, max(1, (Np // 128) // 2))
    tn = 128 * _largest_divisor_leq(Np // 128, tn_units_target)
    nt = Np // tn

    tk = 128 * _largest_divisor_leq(Kp // 128, max(1, tk_t // 128))
    kt = Kp // tk

    # --- cost estimate (true HBM traffic incl. re-reads) ---------------------
    cost = pl.CostEstimate(
        flops=2 * Mp * Np * Kp,
        transcendentals=0,
        bytes_accessed=(nt * Mp * Kp * cd_bytes
                        + mt * Kp * Np * cd_bytes
                        + Mp * Np * out_bytes),
    )

    use_scratch = False
    use_buffered_w = False
    if kt == 1:
        # Single K step: skip reduction axis, scratch and pl.when entirely.
        kernel = _linear_kernel_single
        grid = (mt, nt)
        in_specs = [
            pl.BlockSpec((tm, tk), lambda i, j: (i, 0)),
            pl.BlockSpec((tn, tk), lambda i, j: (j, 0)),   # weight kept (N, K)
        ]
        out_specs = pl.BlockSpec((tm, tn), lambda i, j: (i, j))
        scratch_shapes = []
        dim_sem = ("parallel", "parallel")
    else:
        grid = (mt, nt, kt)                                # reduction axis last
        # Small-M weight-streaming regime: triple-buffer the weight DMA.
        use_buffered_w = (mt == 1 and kt >= 3)
        if use_buffered_w:
            w_spec = pl.BlockSpec((tn, tk), lambda i, j, k: (j, k),
                                  pipeline_mode=pl.Buffered(3))
        else:
            w_spec = pl.BlockSpec((tn, tk), lambda i, j, k: (j, k))
        in_specs = [
            pl.BlockSpec((tm, tk), lambda i, j, k: (i, k)),
            w_spec,
        ]
        out_specs = pl.BlockSpec((tm, tn), lambda i, j, k: (i, j))
        dim_sem = ("parallel", "parallel", "arbitrary")
        if jnp.dtype(out_dtype) == jnp.dtype(jnp.float32):
            kernel = _linear_kernel_acc_in_out
            scratch_shapes = []
        else:
            kernel = _linear_kernel_acc_scratch
            scratch_shapes = [pltpu.VMEM((tm, tn), jnp.float32)]
            use_scratch = True

    # --- VMEM budget ----------------------------------------------------------
    w_bufs = 3 if use_buffered_w else 2
    footprint = (
        2 * tm * tk * cd_bytes
        + w_bufs * tk * tn * cd_bytes
        + 2 * tm * tn * out_bytes
        + (tm * tn * 4 if use_scratch else 0)
    )
    vmem_limit = int(min(cap, max(2 * footprint, 32 * 1024 * 1024)))

    out = pl.pallas_call(
        kernel,
        out_shape=jax.ShapeDtypeStruct((Mp, Np), out_dtype),
        grid_spec=pltpu.PrefetchScalarGridSpec(
            num_scalar_prefetch=0,
            grid=grid,
            in_specs=in_specs,
            out_specs=out_specs,
            scratch_shapes=scratch_shapes,
        ),
        compiler_params=pltpu.CompilerParams(
            dimension_semantics=dim_sem,
            vmem_limit_bytes=vmem_limit,
        ),
        cost_estimate=cost,
    )(x2, w)

    if (Mp, Np) != (M, N):
        out = out[:M, :N]
    return out.reshape(orig_shape[:-1] + (N,))


# ----------------------------------------------------------------------------
# Demo / correctness checks
# ----------------------------------------------------------------------------
if __name__ == "__main__":
    key = jax.random.PRNGKey(0)
    kx, kw = jax.random.split(key)

    # Small shapes consistent with MyLinear(in_dim=32, out_dim=64, bias=False).
    batch, in_dim, out_dim = 8, 32, 64
    x = jax.random.normal(kx, (batch, in_dim), dtype=jnp.float32)
    bound = 1.0 / jnp.sqrt(in_dim)
    weight = jax.random.uniform(
        kw, (out_dim, in_dim), dtype=jnp.float32, minval=-bound, maxval=bound
    )

    y = my_linear(x, weight)
    jax.block_until_ready(y)
    y_ref = x @ weight.T
    assert y.shape == (batch, out_dim)
    assert y.dtype == x.dtype
    # bf16 operands + f32 accumulation -> loose-ish tolerance vs f32 reference.
    assert jnp.allclose(y, y_ref, atol=2e-2, rtol=2e-2), "single-tile mismatch"

    # Exercise the tiled-reduction path (kt>1, accumulate-into-output, nt=2,
    # Buffered(3) weight stream) with small forced tiles.
    k2, k3 = jax.random.split(kw)
    M2, K2, N2 = 32, 512, 256
    x_big = jax.random.normal(k2, (M2, K2), dtype=jnp.float32)
    w_big = jax.random.uniform(
        k3, (N2, K2), dtype=jnp.float32,
        minval=-1.0 / jnp.sqrt(K2), maxval=1.0 / jnp.sqrt(K2)
    )
    y2 = my_linear(x_big, w_big, tm=32, tn=128, tk=128)
    jax.block_until_ready(y2)
    y2_ref = x_big @ w_big.T
    assert y2.shape == (M2, N2)
    assert jnp.allclose(y2, y2_ref, atol=5e-2, rtol=5e-2), "reduction mismatch"

    # Exercise the scratch-accumulator path (narrow bf16 output dtype).
    y3 = my_linear(x_big.astype(jnp.bfloat16), w_big, tm=32, tn=128, tk=128)
    jax.block_until_ready(y3)
    assert y3.dtype == jnp.bfloat16
    assert jnp.allclose(
        y3.astype(jnp.float32), y2_ref, atol=8e-2, rtol=8e-2
    ), "scratch-accumulator mismatch"

    print("KERNEL_OK")
</pallas_src>

<mosaic_0001>
module attributes {stable_mosaic.version = 11 : i64} {
  func.func @_linear_kernel_single(%arg0: i32, %arg1: i32, %arg2: memref<16x128xbf16, #tpu.memory_space<vmem>>, %arg3: memref<128x128xbf16, #tpu.memory_space<vmem>>, %arg4: memref<16x128xf32, #tpu.memory_space<vmem>>) attributes {dimension_semantics = [#tpu.dimension_semantics<parallel>, #tpu.dimension_semantics<parallel>], iteration_bounds = array<i64: 1, 1>, scalar_prefetch = 0 : i64, scratch_operands = 0 : i64, tpu.core_type = #tpu.core_type<tc>, window_params = [{transform_indices = @transform_0, window_bounds = array<i64: 16, 128>}, {transform_indices = @transform_1, window_bounds = array<i64: 128, 128>}, {transform_indices = @transform_2, window_bounds = array<i64: 16, 128>}]} {
    %c0 = arith.constant 0 : index
    %c0_0 = arith.constant 0 : index
    %0 = vector.load %arg2[%c0, %c0_0] : memref<16x128xbf16, #tpu.memory_space<vmem>>, vector<16x128xbf16>
    %c0_1 = arith.constant 0 : index
    %c0_2 = arith.constant 0 : index
    %1 = vector.load %arg3[%c0_1, %c0_2] : memref<128x128xbf16, #tpu.memory_space<vmem>>, vector<128x128xbf16>
    %cst = arith.constant dense<0.000000e+00> : vector<16x128xf32>
    %2 = tpu.matmul %0, %1, %cst {dimension_numbers = #tpu.dot_dimension_numbers<[1], [1], [0], [0], [0, 0, 1, 0], [], []>} : vector<16x128xbf16>, vector<128x128xbf16>, vector<16x128xf32> -> vector<16x128xf32>
    %c0_3 = arith.constant 0 : index
    %c0_4 = arith.constant 0 : index
    %3 = vector.load %arg4[%c0_3, %c0_4] : memref<16x128xf32, #tpu.memory_space<vmem>>, vector<16x128xf32>
    tpu.vector_store %arg4[%c0_3, %c0_4], %2 {strides = array<i32>} : memref<16x128xf32, #tpu.memory_space<vmem>>, vector<16x128xf32>,
    return
  }
  func.func @transform_0(%arg0: i32, %arg1: i32) -> (i32, i32) {
    %c0_i32 = arith.constant 0 : i32
    %c0_i32_0 = arith.constant 0 : i32
    return %arg0, %c0_i32 : i32, i32
  }
  func.func @transform_1(%arg0: i32, %arg1: i32) -> (i32, i32) {
    %c0_i32 = arith.constant 0 : i32
    %c0_i32_0 = arith.constant 0 : i32
    return %arg1, %c0_i32 : i32, i32
  }
  func.func @transform_2(%arg0: i32, %arg1: i32) -> (i32, i32) {
    %c0_i32 = arith.constant 0 : i32
    return %arg0, %arg1 : i32, i32
  }
}

</mosaic_0001>

<llo_original>
// kernel: tpu_custom_call.1
$region0: #{tpu_custom_call.1}
  #allocation0 [shape = 'u32[]', space=smem, size = 0x4, offset = 0x4, fixed_abs, tag = 'smem constant byte address 0x4 - core index']
  #allocation1 [shape = 'u32[144,128]{1,0:T(1,128)}', space=vmem, size = 0x12000, scoped, tag = 'internal scratch']
  %s0 = inlined_call_operand.hbm [shape: bf16[16,128], index: 0, kind: input, shape index: {}]
  %s1 = inlined_call_operand.hbm [shape: bf16[128,128], index: 1, kind: input, shape index: {}]
  %s2 = inlined_call_operand.hbm [shape: f32[16,128], index: 2, kind: output, shape index: {}]
  %s3 = sld [smem:[#allocation0]]
  $region26: #{tpu_custom_call.1} parent=0
    _
  %s5 = ssub.s32 1, %s3
  %s6 = scalar_select 0, %s5, %s3
  $region1: #{tpu_custom_call.1} parent=0
    #allocation2 [shape = 'u8[4096]{0}', space=vmem, size = 0x1000, scoped, tag = 'input window, operand 0, single buffered']
    #allocation3 [shape = 's32[1]{0}', space=sflag, size = 0x4, scoped, tag = 'scoped memory for tpu_custom_call.1']
    #allocation4 [shape = 's32[1]{0}', space=sflag, size = 0x4, scoped, tag = 'scoped memory for tpu_custom_call.1']
    #allocation5 [shape = 'u8[32768]{0}', space=vmem, size = 0x8000, scoped, tag = 'input window, operand 1, single buffered']
    #allocation6 [shape = 's32[1]{0}', space=sflag, size = 0x4, scoped, tag = 'scoped memory for tpu_custom_call.1']
    #allocation7 [shape = 'u8[8192]{0}', space=vmem, size = 0x2000, scoped, tag = 'output window, operand 0, single buffered']
    %7 = vsyncpa [#allocation3], 0
    %8 = vsyncpa [#allocation6], 0
    %9 = vsyncpa [#allocation4], 0
    // Predicated region
    $region2: #{tpu_custom_call.1} parent=1 // pred_check
      _
    $region3: #{tpu_custom_call.1} parent=1 // pred_check_branch
      %11 = sbr.rel (0) target = $region5
    $region4: #{tpu_custom_call.1} parent=1 // pred_region
      %s13 = ssub.s32 128, 128
      %14 = vsyncadd [#allocation3], %s13
      %s15 = sshll.u32 [#allocation2], 4
      %s16 = int_to_ptr.vmem [resolvable:$true] %s15
      %21 = dma.hbm_to_vmem [thread:$0]  %s0, 128, %s16, [#allocation3], 64, 64, 4
    $region5: #{tpu_custom_call.1} parent=1 // pred_fallthru
      _
    // Predicated region
    $region6: #{tpu_custom_call.1} parent=1 // pred_check
      _
    $region7: #{tpu_custom_call.1} parent=1 // pred_check_branch
      %23 = sbr.rel (0) target = $region9
    $region8: #{tpu_custom_call.1} parent=1 // pred_region
      %s25 = ssub.s32 1024, 1024
      %26 = vsyncadd [#allocation6], %s25
      %s27 = sshll.u32 [#allocation5], 4
      %s28 = int_to_ptr.vmem [resolvable:$true] %s27
      %33 = dma.hbm_to_vmem [thread:$0]  %s1, 1024, %s28, [#allocation6], 64, 64, 4
    $region9: #{tpu_custom_call.1} parent=1 // pred_fallthru
      _
    // Predicated region
    $region10: #{tpu_custom_call.1} parent=1 // pred_check
      _
    $region11: #{tpu_custom_call.1} parent=1 // pred_check_branch
      %35 = sbr.rel (0) target = $region13
    $region12: #{tpu_custom_call.1} parent=1 // pred_region
      %36 = dma.done [#allocation3], 128
    $region13: #{tpu_custom_call.1} parent=1 // pred_fallthru
      _
    // Predicated region
    $region14: #{tpu_custom_call.1} parent=1 // pred_check
      _
    $region15: #{tpu_custom_call.1} parent=1 // pred_check_branch
      %38 = sbr.rel (0) target = $region17
    $region16: #{tpu_custom_call.1} parent=1 // pred_region
      %39 = dma.done [#allocation6], 1024
    $region17: #{tpu_custom_call.1} parent=1 // pred_fallthru
      _
    %v41 = vld [vmem:[#allocation2] sm:$0xf]
    %v42 = vld [vmem:[#allocation2 + $0x4] sm:$0xf]
    %v43 = vld [vmem:[#allocation5] sm:$0xf]
    %v44 = vld [vmem:[#allocation5 + $0x4] sm:$0xf]
    %v45 = vld [vmem:[#allocation5 + $0x8] sm:$0xf]
    %v46 = vld [vmem:[#allocation5 + $0xc] sm:$0xf]
    %v47 = vld [vmem:[#allocation5 + $0x10] sm:$0xf]
    %v48 = vld [vmem:[#allocation5 + $0x14] sm:$0xf]
    %v49 = vld [vmem:[#allocation5 + $0x18] sm:$0xf]
    %v50 = vld [vmem:[#allocation5 + $0x1c] sm:$0xf]
    %v51 = vld [vmem:[#allocation5 + $0x20] sm:$0xf]
    %v52 = vld [vmem:[#allocation5 + $0x24] sm:$0xf]
    %v53 = vld [vmem:[#allocation5 + $0x28] sm:$0xf]
    %v54 = vld [vmem:[#allocation5 + $0x2c] sm:$0xf]
    %v55 = vld [vmem:[#allocation5 + $0x30] sm:$0xf]
    %v56 = vld [vmem:[#allocation5 + $0x34] sm:$0xf]
    %v57 = vld [vmem:[#allocation5 + $0x38] sm:$0xf]
    %v58 = vld [vmem:[#allocation5 + $0x3c] sm:$0xf]
    %v61 = vunpack.c.l.b16 %v41
    %v62 = vunpack.c.l.b16 %v42
    %v63 = vpack.c.b16 %v62, %v61
    %v81 = vunpack.c.l.b16 %v43
    %v82 = vunpack.c.l.b16 %v44
    %v83 = vunpack.c.l.b16 %v45
    %v84 = vunpack.c.l.b16 %v46
    %v85 = vunpack.c.l.b16 %v47
    %v86 = vunpack.c.l.b16 %v48
    %v87 = vunpack.c.l.b16 %v49
    %v88 = vunpack.c.l.b16 %v50
    %v89 = vunpack.c.l.b16 %v51
    %v90 = vunpack.c.l.b16 %v52
    %v91 = vunpack.c.l.b16 %v53
    %v92 = vunpack.c.l.b16 %v54
    %v93 = vunpack.c.l.b16 %v55
    %v94 = vunpack.c.l.b16 %v56
    %v95 = vunpack.c.l.b16 %v57
    %v96 = vunpack.c.l.b16 %v58
    %v97 = vpack.c.b16 %v82, %v81
    %v98 = vpack.c.b16 %v84, %v83
    %v99 = vpack.c.b16 %v86, %v85
    %v100 = vpack.c.b16 %v88, %v87
    %v101 = vpack.c.b16 %v90, %v89
    %v102 = vpack.c.b16 %v92, %v91
    %v103 = vpack.c.b16 %v94, %v93
    %v104 = vpack.c.b16 %v96, %v95
    %113 = vmatprep.subr.bf16.mxu0 0
    %114 = vmatpush1.bf16.xpose.msra.mxu0 %v97
    %115 = vmatprep.subr.bf16.mxu0 0
    %116 = vmatpush1.bf16.xpose.msra.mxu0 %v98
    %117 = vmatprep.subr.bf16.mxu0 0
    %118 = vmatpush1.bf16.xpose.msra.mxu0 %v99
    %119 = vmatprep.subr.bf16.mxu0 0
    %120 = vmatpush1.bf16.xpose.msra.mxu0 %v100
    %121 = vmatprep.subr.bf16.mxu0 0
    %122 = vmatpush1.bf16.xpose.msra.mxu0 %v101
    %123 = vmatprep.subr.bf16.mxu0 0
    %124 = vmatpush1.bf16.xpose.msra.mxu0 %v102
    %125 = vmatprep.subr.bf16.mxu0 0
    %126 = vmatpush1.bf16.xpose.msra.mxu0 %v103
    %127 = vmatprep.subr.bf16.mxu0 0
    %128 = vmatpush1.bf16.xpose.msra.mxu0 %v104
    %129 = vmatprep.subr.bf16.mxu0 0
    %130 = vmatpush1.bf16.xpose.msra.mxu0 0
    %131 = vmatprep.subr.bf16.mxu0 0
    %132 = vmatpush1.bf16.xpose.msra.mxu0 0
    %133 = vmatprep.subr.bf16.mxu0 0
    %134 = vmatpush1.bf16.xpose.msra.mxu0 0
    %135 = vmatprep.subr.bf16.mxu0 0
    %136 = vmatpush1.bf16.xpose.msra.mxu0 0
    %137 = vmatprep.subr.bf16.mxu0 0
    %138 = vmatpush1.bf16.xpose.msra.mxu0 0
    %139 = vmatprep.subr.bf16.mxu0 0
    %140 = vmatpush1.bf16.xpose.msra.mxu0 0
    %141 = vmatprep.subr.bf16.mxu0 0
    %142 = vmatpush1.bf16.xpose.msra.mxu0 0
    %143 = vmatprep.subr.bf16.mxu0 0
    %144 = vmatpush1.bf16.xpose.msra.mxu0 0
    %145 = vmatprep.mubr.bf16.mxu0 0
    %146 = vmatmul.mubr.bf16.gmra.mrb[0].mxu0 %v63
    %v147 = vpop.f32.mrb[0].mxu0
    %v148 = vadd.f32 0.0, %v147
    %v149 = vpop.f32.mrb[0].mxu0
    %v150 = vpop.f32.mrb[0].mxu0
    %v151 = vadd.f32 0.0, %v150
    %v152 = vpop.f32.mrb[0].mxu0
    %153 = vdwg.mxu0
    %154 = vst [vmem:[#allocation7] sm:$0xff] %v148
    %155 = vst [vmem:[#allocation7 + $0x8] sm:$0xff] %v151
    // Predicated region
    $region18: #{tpu_custom_call.1} parent=1 // pred_check
      _
    $region19: #{tpu_custom_call.1} parent=1 // pred_check_branch
      %157 = sbr.rel (0) target = $region21
    $region20: #{tpu_custom_call.1} parent=1 // pred_region
      %s159 = ssub.s32 256, 256
      %160 = vsyncadd [#allocation4], %s159
      %s161 = sshll.u32 [#allocation7], 4
      %s162 = int_to_ptr.vmem [resolvable:$true] %s161
      %167 = dma.vmem_to_hbm [thread:$0]  %s162, 256, %s2, [#allocation4], 128, 128, 8
    $region21: #{tpu_custom_call.1} parent=1 // pred_fallthru
      _
    // Predicated region
    $region22: #{tpu_custom_call.1} parent=1 // pred_check
      _
    $region23: #{tpu_custom_call.1} parent=1 // pred_check_branch
      %169 = sbr.rel (0) target = $region25
    $region24: #{tpu_custom_call.1} parent=1 // pred_region
      %170 = dma.done [#allocation4], 256
    $region25: #{tpu_custom_call.1} parent=1 // pred_fallthru
      _
    %171 = vsyncpa [#allocation3], 1
    %172 = vsyncpa [#allocation6], 1
    %173 = vsyncpa [#allocation4], 1

</llo_original>
